<compile_context>
chip_gen: v7x
topology: tpu7x:2x2x1
jax: 0.10.0
libtpu: 0.0.40
codegen_flags: <defaults>
</compile_context>

<pallas_src>
import numpy as np
import jax
import jax.numpy as jnp
from jax import lax
from jax.experimental import pallas as pl
from jax.experimental.pallas import tpu as pltpu


def position_encoding_init(n_position, d_pos_vec):
    """NumPy replica of the PyTorch helper (float32 table)."""
    position_enc = np.array(
        [
            [pos / np.power(10000, 2 * i / d_pos_vec) for i in range(d_pos_vec)]
            if pos != 0
            else np.zeros(d_pos_vec)
            for pos in range(n_position)
        ]
    )
    position_enc[1:, 0::2] = np.sin(position_enc[1:, 0::2])
    position_enc[1:, 1::2] = np.cos(position_enc[1:, 1::2])
    return position_enc.astype(np.float32)


# ---------------------------------------------------------------------------
# Fast path: VMEM-resident table + exact one-hot MXU gather.
# ---------------------------------------------------------------------------
def _onehot_gather_kernel(idx_ref, table_ref, o_ref):
    # idx_ref:   (m, 1)   int32 VMEM block (row indices for this output tile)
    # table_ref: (P, Dp)  float32, full table (constant index_map -> loaded once)
    # o_ref:     (m, Dp)  float32 output tile
    idx = idx_ref[...]                                        # (m, 1)
    m = idx.shape[0]
    p = table_ref.shape[0]
    cols = lax.broadcasted_iota(jnp.int32, (m, p), 1)         # (m, P)
    one_hot = (idx == cols).astype(table_ref.dtype)           # exact 0.0 / 1.0
    o_ref[...] = jnp.dot(
        one_hot,
        table_ref[...],
        precision=lax.Precision.HIGHEST,
        preferred_element_type=jnp.float32,
    ).astype(o_ref.dtype)


# ---------------------------------------------------------------------------
# Fallback path (table too large to keep resident in VMEM): per-row DMA
# gather straight from HBM into the output VMEM tile.
# ---------------------------------------------------------------------------
def _make_dma_gather_kernel(rows_per_step):
    def _kernel(pos_ref, table_hbm, o_ref, sem):
        # pos_ref:   (N_pad,) int32 in SMEM (scalar prefetch)
        # table_hbm: (P, Dp) float32 ref left in HBM (memory_space=pl.ANY)
        # o_ref:     (rows_per_step, Dp) float32 VMEM output tile
        # sem:       (rows_per_step,) DMA completion semaphores
        base = pl.program_id(0) * rows_per_step
        copies = []
        for r in range(rows_per_step):          # unrolled: rows_per_step is static
            idx = pos_ref[base + r]              # scalar read from SMEM
            cp = pltpu.make_async_copy(
                table_hbm.at[pl.ds(idx, 1), :],
                o_ref.at[pl.ds(r, 1), :],
                sem.at[r],
            )
            cp.start()
            copies.append(cp)
        for cp in copies:
            cp.wait()

    return _kernel


_VMEM_BUDGET_BYTES = 40 * 1024 * 1024   # conservative: v7x has 64 MiB physical VMEM


def _round_up(x, mult):
    return (x + mult - 1) // mult * mult


def _choose_rows_per_step(n_rows, per_row_bytes, budget_bytes):
    """Largest row tile that fits the VMEM budget; prefer tiles that divide
    n_rows (no padded tail) and give >= 8 grid steps (v7x megacore)."""
    cands = [m for m in (2048, 1024, 512, 256, 128, 64, 32, 16, 8)
             if 2 * m * per_row_bytes <= budget_bytes]
    if not cands:
        cands = [8]
    for min_steps in (8, 2, 1):
        for m in cands:
            if n_rows % m == 0 and n_rows // m >= min_steps:
                return m
    return cands[0]   # no clean divisor -> pad + slice the ragged tail


def encoder_forward(src_pos, pos_table):
    """src_pos: (B, S) int indices; pos_table: (P, D) float32 -> (B, S, D)."""
    B, S = src_pos.shape
    P, D = pos_table.shape
    n_rows = B * S

    # Clamp indices into range (matches jnp.take's safe gather semantics and
    # keeps the fallback DMA source in-bounds for malformed inputs).
    pos_flat = jnp.clip(src_pos.reshape(-1).astype(jnp.int32), 0, P - 1)

    # Lane-dense output: pad the feature dim to a multiple of 128 once.
    d_pad = _round_up(D, 128)
    table = pos_table
    if d_pad != D:
        table = jnp.pad(pos_table, ((0, 0), (0, d_pad - D)))

    table_bytes = P * d_pad * 4
    per_row_bytes = d_pad * 4 + 4                       # output row + index
    use_vmem_table = (2 * table_bytes + 2 * 8 * per_row_bytes) <= _VMEM_BUDGET_BYTES

    if use_vmem_table:
        m = _choose_rows_per_step(
            n_rows, per_row_bytes, _VMEM_BUDGET_BYTES - 2 * table_bytes)
        n_steps = pl.cdiv(n_rows, m)
        n_pad = n_steps * m
        if n_pad != n_rows:
            pos_flat = jnp.pad(pos_flat, (0, n_pad - n_rows))
        idx2d = pos_flat.reshape(n_pad, 1)

        cost = pl.CostEstimate(
            flops=2 * n_pad * P * d_pad,
            transcendentals=0,
            bytes_accessed=n_pad * d_pad * 4 + n_pad * 4 + table_bytes,
        )
        out_flat = pl.pallas_call(
            _onehot_gather_kernel,
            out_shape=jax.ShapeDtypeStruct((n_pad, d_pad), table.dtype),
            grid=(n_steps,),
            in_specs=[
                pl.BlockSpec((m, 1), lambda i: (i, 0)),         # per-tile indices
                pl.BlockSpec((P, d_pad), lambda i: (0, 0)),     # table, VMEM-resident
            ],
            out_specs=pl.BlockSpec((m, d_pad), lambda i: (i, 0)),
            compiler_params=pltpu.CompilerParams(
                dimension_semantics=("parallel",),
                vmem_limit_bytes=48 * 1024 * 1024,
            ),
            cost_estimate=cost,
        )(idx2d, table)
    else:
        # Oversized table: leave it in HBM and DMA-gather row by row.
        # TODO(synk): coalesce contiguous index runs into one large DMA per run.
        m = 32
        n_steps = pl.cdiv(n_rows, m)
        n_pad = n_steps * m
        if n_pad != n_rows:
            pos_flat = jnp.pad(pos_flat, (0, n_pad - n_rows))
        out_flat = pl.pallas_call(
            _make_dma_gather_kernel(m),
            out_shape=jax.ShapeDtypeStruct((n_pad, d_pad), table.dtype),
            grid_spec=pltpu.PrefetchScalarGridSpec(
                num_scalar_prefetch=1,                       # indices -> SMEM
                grid=(n_steps,),
                in_specs=[pl.BlockSpec(memory_space=pl.ANY)],
                out_specs=pl.BlockSpec((m, d_pad), lambda t, pos: (t, 0)),
                scratch_shapes=[pltpu.SemaphoreType.DMA((m,))],
            ),
            compiler_params=pltpu.CompilerParams(
                dimension_semantics=("parallel",),
            ),
        )(pos_flat, table)

    out = out_flat
    if n_pad != n_rows:
        out = out[:n_rows]
    if d_pad != D:
        out = out[:, :D]
    return out.reshape(B, S, D)


if __name__ == "__main__":
    # Small shapes consistent with the module.
    n_position = 16
    d_word_vec = 128
    B, S = 2, 8

    # The sinusoidal table itself is deterministic.
    pos_table = jnp.asarray(position_encoding_init(n_position, d_word_vec))

    # Deterministic example input: integer positions in [0, n_position).
    key = jax.random.PRNGKey(0)
    src_pos = jax.random.randint(key, (B, S), minval=0, maxval=n_position,
                                 dtype=jnp.int32)

    out = encoder_forward(src_pos, pos_table)
    out = jax.block_until_ready(out)

    # Reference check against a plain JAX gather (== nn.Embedding lookup).
    ref = jnp.take(pos_table, src_pos, axis=0)
    assert out.shape == (B, S, d_word_vec), out.shape
    assert out.dtype == jnp.float32
    np.testing.assert_allclose(np.asarray(out), np.asarray(ref), rtol=1e-6, atol=1e-6)

    print("KERNEL_OK")
</pallas_src>

<mosaic_0001>
module attributes {stable_mosaic.version = 11 : i64} {
  func.func @_onehot_gather_kernel(%arg0: i32, %arg1: memref<8x1xi32, #tpu.memory_space<vmem>>, %arg2: memref<16x128xf32, #tpu.memory_space<vmem>>, %arg3: memref<8x128xf32, #tpu.memory_space<vmem>>) attributes {dimension_semantics = [#tpu.dimension_semantics<parallel>], iteration_bounds = array<i64: 2>, scalar_prefetch = 0 : i64, scratch_operands = 0 : i64, tpu.core_type = #tpu.core_type<tc>, window_params = [{transform_indices = @transform_0, window_bounds = array<i64: 8, 1>}, {pipeline_mode = #tpu.pipeline_mode<synchronous>, transform_indices = @transform_1, window_bounds = array<i64: 16, 128>}, {transform_indices = @transform_2, window_bounds = array<i64: 8, 128>}]} {
    %c0 = arith.constant 0 : index
    %c0_0 = arith.constant 0 : index
    %0 = vector.load %arg1[%c0, %c0_0] : memref<8x1xi32, #tpu.memory_space<vmem>>, vector<8x1xi32>
    %1 = tpu.iota {dimensions = array<i32: 1>} : vector<8x16xi32>
    %2 = vector.broadcast %0 : vector<8x1xi32> to vector<8x16xi32>
    %3 = arith.cmpi eq, %2, %1 : vector<8x16xi32>
    %4 = arith.extui %3 : vector<8x16xi1> to vector<8x16xi32>
    %5 = arith.sitofp %4 : vector<8x16xi32> to vector<8x16xf32>
    %c0_1 = arith.constant 0 : index
    %c0_2 = arith.constant 0 : index
    %6 = vector.load %arg2[%c0_1, %c0_2] : memref<16x128xf32, #tpu.memory_space<vmem>>, vector<16x128xf32>
    %cst = arith.constant dense<0.000000e+00> : vector<8x128xf32>
    %7 = tpu.matmul %5, %6, %cst {dimension_numbers = #tpu.dot_dimension_numbers<[1], [0], [0], [1], [0, 0, 1, 1], [], []>, precision = #tpu.contract_precision<fp32>} : vector<8x16xf32>, vector<16x128xf32>, vector<8x128xf32> -> vector<8x128xf32>
    %c0_3 = arith.constant 0 : index
    %c0_4 = arith.constant 0 : index
    %8 = vector.load %arg3[%c0_3, %c0_4] : memref<8x128xf32, #tpu.memory_space<vmem>>, vector<8x128xf32>
    tpu.vector_store %arg3[%c0_3, %c0_4], %7 {strides = array<i32>} : memref<8x128xf32, #tpu.memory_space<vmem>>, vector<8x128xf32>,
    return
  }
  func.func @transform_0(%arg0: i32) -> (i32, i32) {
    %c0_i32 = arith.constant 0 : i32
    %c0_i32_0 = arith.constant 0 : i32
    return %arg0, %c0_i32 : i32, i32
  }
  func.func @transform_1(%arg0: i32) -> (i32, i32) {
    %c0_i32 = arith.constant 0 : i32
    %c0_i32_0 = arith.constant 0 : i32
    %c0_i32_1 = arith.constant 0 : i32
    return %c0_i32, %c0_i32_0 : i32, i32
  }
  func.func @transform_2(%arg0: i32) -> (i32, i32) {
    %c0_i32 = arith.constant 0 : i32
    %c0_i32_0 = arith.constant 0 : i32
    return %arg0, %c0_i32 : i32, i32
  }
}

</mosaic_0001>

<llo_original>
// kernel: tpu_custom_call.1
$region0: #{tpu_custom_call.1}
  #allocation0 [shape = 'u32[]', space=smem, size = 0x4, offset = 0x4, fixed_abs, tag = 'smem constant byte address 0x4 - core index']
  #allocation1 [shape = 'u32[144,128]{1,0:T(1,128)}', space=vmem, size = 0x12000, scoped, tag = 'internal scratch']
  %s0 = inlined_call_operand.vmem [shape: s32[16,1], index: 0, kind: input, shape index: {}]
  %s1 = inlined_call_operand.vmem [shape: f32[16,128], index: 1, kind: input, shape index: {}]
  %s2 = inlined_call_operand.hbm [shape: f32[16,128], index: 2, kind: output, shape index: {}]
  %s3 = sld [smem:[#allocation0]]
  $region41: #{tpu_custom_call.1} parent=0
    _
  %s5 = ssub.s32 1, %s3
  %s6 = scalar_select 0, %s5, %s3
  $region1: #{tpu_custom_call.1} parent=0
    #allocation2 [shape = 'u8[8192]{0}', space=vmem, size = 0x2000, scoped, tag = 'output window, operand 0']
    #allocation3 [shape = 's32[2]{0}', space=sflag, size = 0x8, scoped, tag = 'scoped memory for tpu_custom_call.1']
    %7 = vsyncpa [#allocation3], 0
    %s8 = scalar_lea.sflag [#allocation3], 1
    %9 = vsyncpa %s8, 0
    loop: start=0, step=1, limit=4
    $region2: #{tpu_custom_call.1} parent=1 // loop_pre_header
      _
    $region3: #{tpu_custom_call.1} parent=1 // loop_header
      %s11 = sphi 0, %s15
      %p12 = scmp.ge.s32.totalorder %s11, 4
      %s21 = sphi 0, %s23
      %s24 = sphi 0, %s21
      %s25 = sphi 0, %s24
      %s41 = sphi 0, %s25
      %s45 = sphi 0, %s45
      %s47 = sphi 0, %s45
      %s48 = sphi 0, %s47
      %s62 = sphi 0, %s48
      %s68 = sphi 0, %s70
      %s71 = sphi 0, %s68
      %s72 = sphi 0, %s71
      %s88 = sphi 0, %s72
    $region4: #{tpu_custom_call.1} parent=1 // loop_header_branch
      %14 = sbr.rel (%p12) target = $region8
    $region5: #{tpu_custom_call.1} parent=1 // loop_body
      %s16 = ssub.s32 %s11, 1
      %s17 = ssub.s32 %s11, 2
      %s18 = sadd.s32 %s11, 1
      %s19 = ssub.s32 %s11, %s18
      %p20 = scmp.eq.s32.totalorder %s19, 0
      %s22 = sadd.s32 %s21, 1
      %s23 = scalar_select %p20, %s21, %s22
      %p26 = pneg %p20
      %p27 = scmp.eq.s32.totalorder %s11, 1
      %p28 = por %p26, %p27
      %p29 = scmp.ne.s32.totalorder %s21, %s24
      %p30 = scmp.eq.s32.totalorder %s11, 0
      %p31 = por %p29, %p30
      %p32 = scmp.ne.s32.totalorder %s21, %s24
      %p33 = scmp.eq.s32.totalorder %s16, 1
      %p34 = por %p32, %p33
      %p35 = scmp.ne.s32.totalorder %s24, %s25
      %p36 = scmp.eq.s32.totalorder %s16, 0
      %p37 = por %p35, %p36
      %p38 = scmp.ne.s32.totalorder %s24, %s25
      %p39 = scmp.eq.s32.totalorder %s17, 1
      %p40 = por %p38, %p39
      %p42 = scmp.ne.s32.totalorder %s25, %s41
      %p43 = scmp.eq.s32.totalorder %s17, 0
      %p44 = por %p42, %p43
      %s46 = sadd.s32 %s45, 1
      %p49 = scmp.eq.s32.totalorder %s11, 1
      %p50 = scmp.ne.s32.totalorder %s45, %s47
      %p51 = scmp.eq.s32.totalorder %s11, 0
      %p52 = por %p50, %p51
      %p53 = scmp.ne.s32.totalorder %s45, %s47
      %p54 = scmp.eq.s32.totalorder %s16, 1
      %p55 = por %p53, %p54
      %p56 = scmp.ne.s32.totalorder %s47, %s48
      %p57 = scmp.eq.s32.totalorder %s16, 0
      %p58 = por %p56, %p57
      %p59 = scmp.ne.s32.totalorder %s47, %s48
      %p60 = scmp.eq.s32.totalorder %s17, 1
      %p61 = por %p59, %p60
      %p63 = scmp.ne.s32.totalorder %s48, %s62
      %p64 = scmp.eq.s32.totalorder %s17, 0
      %p65 = por %p63, %p64
      %s66 = ssub.s32 %s11, %s18
      %p67 = scmp.eq.s32.totalorder %s66, 0
      %s69 = sadd.s32 %s68, 1
      %s70 = scalar_select %p67, %s68, %s69
      %p73 = pneg %p67
      %p74 = scmp.eq.s32.totalorder %s11, 1
      %p75 = por %p73, %p74
      %p76 = scmp.ne.s32.totalorder %s68, %s71
      %p77 = scmp.eq.s32.totalorder %s11, 0
      %p78 = por %p76, %p77
      %p79 = scmp.ne.s32.totalorder %s68, %s71
      %p80 = scmp.eq.s32.totalorder %s16, 1
      %p81 = por %p79, %p80
      %p82 = scmp.ne.s32.totalorder %s71, %s72
      %p83 = scmp.eq.s32.totalorder %s16, 0
      %p84 = por %p82, %p83
      %p85 = scmp.ne.s32.totalorder %s71, %s72
      %p86 = scmp.eq.s32.totalorder %s17, 1
      %p87 = por %p85, %p86
      %p89 = scmp.ne.s32.totalorder %s72, %s88
      %p90 = scmp.eq.s32.totalorder %s17, 0
      %p91 = por %p89, %p90
      %p92 = scmp.le.s32.totalorder 1, %s11
      %p93 = scmp.lt.s32.totalorder %s11, 3
      %p94 = pnand %p92, %p93
      %p95 = pneg %p94
      // Predicated region
      $region9: #{tpu_custom_call.1} parent=5 // pred_check
        _
      $region10: #{tpu_custom_call.1} parent=5 // pred_check_branch
        %97 = sbr.rel (%p94) target = $region12
      $region11: #{tpu_custom_call.1} parent=5 // pred_region
        %s98 = ssub.s32 %s11, 1
        // Predicated region
        $region13: #{tpu_custom_call.1} parent=11 // pred_check
          %p99 = pneg %p58
        $region14: #{tpu_custom_call.1} parent=11 // pred_check_branch
          %101 = sbr.rel (%p99) target = $region16
        $region15: #{tpu_custom_call.1} parent=11 // pred_region
          _
        $region16: #{tpu_custom_call.1} parent=11 // pred_fallthru
          _
      $region12: #{tpu_custom_call.1} parent=5 // pred_fallthru
        _
      %p102 = scmp.lt.s32.totalorder %s11, 2
      // Predicated region
      $region17: #{tpu_custom_call.1} parent=5 // pred_check
        %p103 = pneg %p102
      $region18: #{tpu_custom_call.1} parent=5 // pred_check_branch
        %105 = sbr.rel (%p103) target = $region20
      $region19: #{tpu_custom_call.1} parent=5 // pred_region
        // Predicated region
        $region21: #{tpu_custom_call.1} parent=19 // pred_check
          %p106 = pneg %p31
        $region22: #{tpu_custom_call.1} parent=19 // pred_check_branch
          %108 = sbr.rel (%p106) target = $region24
        $region23: #{tpu_custom_call.1} parent=19 // pred_region
          %p109 = scmp.lt.s32.totalorder %s11, 1
          %s110 = scalar_select %p109, %s11, 1
          %s111 = smul.addr %s110, 8
          %s112 = scalar_lea.vmem %s0, %s111
        $region24: #{tpu_custom_call.1} parent=19 // pred_fallthru
          _
      $region20: #{tpu_custom_call.1} parent=5 // pred_fallthru
        _
      %p113 = scmp.le.s32.totalorder 1, %s11
      %p114 = scmp.lt.s32.totalorder %s11, 3
      %p115 = pnand %p113, %p114
      %p116 = pneg %p115
      // Predicated region
      $region25: #{tpu_custom_call.1} parent=5 // pred_check
        _
      $region26: #{tpu_custom_call.1} parent=5 // pred_check_branch
        %118 = sbr.rel (%p115) target = $region28
      $region27: #{tpu_custom_call.1} parent=5 // pred_region
        %s119 = ssub.s32 %s11, 1
        %p120 = scmp.lt.s32.totalorder %s16, 1
        %s121 = scalar_select %p120, %s16, 1
        %s122 = smul.addr %s121, 8
        %s123 = scalar_lea.vmem %s0, %s122
        %p124 = pneg %p37
        %p125 = pneg %p34
        %p126 = pneg %p58
        %p127 = pneg %p55
        %p128 = pneg %p84
        %p129 = pneg %p81
        %s130 = sand.u32 %s71, 1
        %s131 = scalar_lea.sflag [#allocation3], %s130
        %s132 = sand.u32 %s71, 1
        %s133 = smul.addr %s132, 8
        %s134 = scalar_lea.vmem [#allocation2], %s133
        %p135 = scmp.lt.s32.totalorder %s16, 1
        %s136 = scalar_select %p135, %s16, 1
        %s137 = smul.addr %s136, 8
        %s138 = scalar_lea.vmem %s0, %s137
        %v139 = vld [vmem:[%s138] sm:$0xff]
        %v140 = vlaneseq
        %v141 = vand.u32 %v140, 127
        %142 = vset.pattern.permute.xlu0 0
        %143 = vperm.xlu0 %142, %v139
        %v144 = vpop.permute.xlu0 %143
        %vm145 = vcmp.eq.s32.totalorder %v144, %v141
        %v146 = vsel %vm145, 1, 0
        %v147 = vcvt.s32.f32 %v146
        %v148 = vld [vmem:[%s1] sm:$0xff]
        %v149 = vld [vmem:[%s1 + $0x8] sm:$0xff]
        %vm150 = vcmask 130048
        %v152 = vsel %vm150, %v147, 0
        %154 = vmatprep.subr.mxu0 0.0
        %v155 = vand.u32 %v148, 4294901760
        %156 = vmatpush1.msra.mxu0 %v155
        %157 = vmatprep.subr.mxu0 0.0
        %v158 = vand.u32 %v149, 4294901760
        %159 = vmatpush1.msra.mxu0 %v158
        %160 = vmatprep.subr.mxu0 0.0
        %161 = vmatpush1.msra.mxu0 0.0
        %162 = vmatprep.subr.mxu0 0.0
        %163 = vmatpush1.msra.mxu0 0.0
        %164 = vmatprep.subr.mxu0 0.0
        %165 = vmatpush1.msra.mxu0 0.0
        %166 = vmatprep.subr.mxu0 0.0
        %167 = vmatpush1.msra.mxu0 0.0
        %168 = vmatprep.subr.mxu0 0.0
        %169 = vmatpush1.msra.mxu0 0.0
        %170 = vmatprep.subr.mxu0 0.0
        %171 = vmatpush1.msra.mxu0 0.0
        %172 = vmatprep.subr.mxu0 0.0
        %173 = vmatpush1.msra.mxu0 0.0
        %174 = vmatprep.subr.mxu0 0.0
        %175 = vmatpush1.msra.mxu0 0.0
        %176 = vmatprep.subr.mxu0 0.0
        %177 = vmatpush1.msra.mxu0 0.0
        %178 = vmatprep.subr.mxu0 0.0
        %179 = vmatpush1.msra.mxu0 0.0
        %180 = vmatprep.subr.mxu0 0.0
        %181 = vmatpush1.msra.mxu0 0.0
        %182 = vmatprep.subr.mxu0 0.0
        %183 = vmatpush1.msra.mxu0 0.0
        %184 = vmatprep.subr.mxu0 0.0
        %185 = vmatpush1.msra.mxu0 0.0
        %186 = vmatprep.subr.mxu0 0.0
        %187 = vmatpush1.msra.mxu0 0.0
        %188 = vmatprep.subr.mxu0 0.0
        %189 = vmatpush1.msra.mxu0 0.0
        %190 = vmatprep.subr.mxu0 0.0
        %191 = vmatpush1.msra.mxu0 0.0
        %192 = vmatprep.subr.mxu0 0.0
        %193 = vmatpush1.msra.mxu0 0.0
        %194 = vmatprep.subr.mxu0 0.0
        %195 = vmatpush1.msra.mxu0 0.0
        %196 = vmatprep.subr.mxu0 0.0
        %197 = vmatpush1.msra.mxu0 0.0
        %198 = vmatprep.subr.mxu0 0.0
        %199 = vmatpush1.msra.mxu0 0.0
        %200 = vmatprep.subr.mxu0 0.0
        %201 = vmatpush1.msra.mxu0 0.0
        %202 = vmatprep.subr.mxu0 0.0
        %203 = vmatpush1.msra.mxu0 0.0
        %204 = vmatprep.subr.mxu0 0.0
        %205 = vmatpush1.msra.mxu0 0.0
        %206 = vmatprep.subr.mxu0 0.0
        %207 = vmatpush1.msra.mxu0 0.0
        %208 = vmatprep.subr.mxu0 0.0
        %209 = vmatpush1.msra.mxu0 0.0
        %210 = vmatprep.subr.mxu0 0.0
        %211 = vmatpush1.msra.mxu0 0.0
        %212 = vmatprep.subr.mxu0 0.0
        %213 = vmatpush1.msra.mxu0 0.0
        %214 = vmatprep.subr.mxu0 0.0
        %215 = vmatpush1.msra.mxu0 0.0
        %216 = vmatprep.subr.mxu0 0.0
        %217 = vmatpush1.msra.mxu0 0.0
        %218 = vmatprep.subr.mxu0 0.0
        %219 = vmatpush1.msra.mxu0 0.0
        %220 = vmatprep.mubr.f32.mxu0 0.0
        %v221 = vand.u32 %v152, 4294901760
        %v222 = vsub.f32 %v152, %v221
        %v223 = vand.u32 %v222, 4294901760
        %v224 = vsub.f32 %v222, %v223
        %v225 = vand.u32 %v224, 4294901760
        %226 = vmatmul.mubr.f32.gmra.mrb[0].mxu0 %v225
        %v227 = vpop.f32.mrb[0].mxu0
        %v228 = vadd.f32 0.0, %v227
        %v229 = vpop.f32.mrb[0].mxu0
        %230 = vdwg.mxu0
        %231 = vmatprep.subr.mxu0 0.0
        %v232 = vand.u32 %v148, 4294901760
        %v233 = vsub.f32 %v148, %v232
        %v234 = vand.u32 %v233, 4294901760
        %v235 = vsub.f32 %v233, %v234
        %v236 = vand.u32 %v235, 4294901760
        %237 = vmatpush1.msra.mxu0 %v236
        %238 = vmatprep.subr.mxu0 0.0
        %v239 = vand.u32 %v149, 4294901760
        %v240 = vsub.f32 %v149, %v239
        %v241 = vand.u32 %v240, 4294901760
        %v242 = vsub.f32 %v240, %v241
        %v243 = vand.u32 %v242, 4294901760
        %244 = vmatpush1.msra.mxu0 %v243
        %245 = vmatprep.subr.mxu0 0.0
        %246 = vmatpush1.msra.mxu0 0.0
        %247 = vmatprep.subr.mxu0 0.0
        %248 = vmatpush1.msra.mxu0 0.0
        %249 = vmatprep.subr.mxu0 0.0
        %250 = vmatpush1.msra.mxu0 0.0
        %251 = vmatprep.subr.mxu0 0.0
        %252 = vmatpush1.msra.mxu0 0.0
        %253 = vmatprep.subr.mxu0 0.0
        %254 = vmatpush1.msra.mxu0 0.0
        %255 = vmatprep.subr.mxu0 0.0
        %256 = vmatpush1.msra.mxu0 0.0
        %257 = vmatprep.subr.mxu0 0.0
        %258 = vmatpush1.msra.mxu0 0.0
        %259 = vmatprep.subr.mxu0 0.0
        %260 = vmatpush1.msra.mxu0 0.0
        %261 = vmatprep.subr.mxu0 0.0
        %262 = vmatpush1.msra.mxu0 0.0
        %263 = vmatprep.subr.mxu0 0.0
        %264 = vmatpush1.msra.mxu0 0.0
        %265 = vmatprep.subr.mxu0 0.0
        %266 = vmatpush1.msra.mxu0 0.0
        %267 = vmatprep.subr.mxu0 0.0
        %268 = vmatpush1.msra.mxu0 0.0
        %269 = vmatprep.subr.mxu0 0.0
        %270 = vmatpush1.msra.mxu0 0.0
        %271 = vmatprep.subr.mxu0 0.0
        %272 = vmatpush1.msra.mxu0 0.0
        %273 = vmatprep.subr.mxu0 0.0
        %274 = vmatpush1.msra.mxu0 0.0
        %275 = vmatprep.subr.mxu0 0.0
        %276 = vmatpush1.msra.mxu0 0.0
        %277 = vmatprep.subr.mxu0 0.0
        %278 = vmatpush1.msra.mxu0 0.0
        %279 = vmatprep.subr.mxu0 0.0
        %280 = vmatpush1.msra.mxu0 0.0
        %281 = vmatprep.subr.mxu0 0.0
        %282 = vmatpush1.msra.mxu0 0.0
        %283 = vmatprep.subr.mxu0 0.0
        %284 = vmatpush1.msra.mxu0 0.0
        %285 = vmatprep.subr.mxu0 0.0
        %286 = vmatpush1.msra.mxu0 0.0
        %287 = vmatprep.subr.mxu0 0.0
        %288 = vmatpush1.msra.mxu0 0.0
        %289 = vmatprep.subr.mxu0 0.0
        %290 = vmatpush1.msra.mxu0 0.0
        %291 = vmatprep.subr.mxu0 0.0
        %292 = vmatpush1.msra.mxu0 0.0
        %293 = vmatprep.subr.mxu0 0.0
        %294 = vmatpush1.msra.mxu0 0.0
        %295 = vmatprep.subr.mxu0 0.0
        %296 = vmatpush1.msra.mxu0 0.0
        %297 = vmatprep.subr.mxu0 0.0
        %298 = vmatpush1.msra.mxu0 0.0
        %299 = vmatprep.subr.mxu0 0.0
        %300 = vmatpush1.msra.mxu0 0.0
        %301 = vmatprep.subr.mxu0 0.0
        %302 = vmatpush1.msra.mxu0 0.0
        %303 = vmatprep.subr.mxu0 0.0
        %304 = vmatpush1.msra.mxu0 0.0
        %305 = vmatprep.mubr.f32.mxu0 0.0
        %v306 = vand.u32 %v152, 4294901760
        %307 = vmatmul.mubr.f32.gmra.mrb[0].mxu0 %v306
        %v308 = vpop.f32.mrb[0].mxu0
        %v309 = vadd.f32 %v228, %v308
        %v310 = vpop.f32.mrb[0].mxu0
        %311 = vdwg.mxu0
        %312 = vmatprep.subr.mxu0 0.0
        %v313 = vand.u32 %v148, 4294901760
        %v314 = vsub.f32 %v148, %v313
        %315 = vmatpush1.msra.mxu0 %v314
        %316 = vmatprep.subr.mxu0 0.0
        %v317 = vand.u32 %v149, 4294901760
        %v318 = vsub.f32 %v149, %v317
        %319 = vmatpush1.msra.mxu0 %v318
        %320 = vmatprep.subr.mxu0 0.0
        %321 = vmatpush1.msra.mxu0 0.0
        %322 = vmatprep.subr.mxu0 0.0
        %323 = vmatpush1.msra.mxu0 0.0
        %324 = vmatprep.subr.mxu0 0.0
        %325 = vmatpush1.msra.mxu0 0.0
        %326 = vmatprep.subr.mxu0 0.0
        %327 = vmatpush1.msra.mxu0 0.0
        %328 = vmatprep.subr.mxu0 0.0
        %329 = vmatpush1.msra.mxu0 0.0
        %330 = vmatprep.subr.mxu0 0.0
        %331 = vmatpush1.msra.mxu0 0.0
        %332 = vmatprep.subr.mxu0 0.0
        %333 = vmatpush1.msra.mxu0 0.0
        %334 = vmatprep.subr.mxu0 0.0
        %335 = vmatpush1.msra.mxu0 0.0
        %336 = vmatprep.subr.mxu0 0.0
        %337 = vmatpush1.msra.mxu0 0.0
        %338 = vmatprep.subr.mxu0 0.0
        %339 = vmatpush1.msra.mxu0 0.0
        %340 = vmatprep.subr.mxu0 0.0
        %341 = vmatpush1.msra.mxu0 0.0
        %342 = vmatprep.subr.mxu0 0.0
        %343 = vmatpush1.msra.mxu0 0.0
        %344 = vmatprep.subr.mxu0 0.0
        %345 = vmatpush1.msra.mxu0 0.0
        %346 = vmatprep.subr.mxu0 0.0
        %347 = vmatpush1.msra.mxu0 0.0
        %348 = vmatprep.subr.mxu0 0.0
        %349 = vmatpush1.msra.mxu0 0.0
        %350 = vmatprep.subr.mxu0 0.0
        %351 = vmatpush1.msra.mxu0 0.0
        %352 = vmatprep.subr.mxu0 0.0
        %353 = vmatpush1.msra.mxu0 0.0
        %354 = vmatprep.subr.mxu0 0.0
        %355 = vmatpush1.msra.mxu0 0.0
        %356 = vmatprep.subr.mxu0 0.0
        %357 = vmatpush1.msra.mxu0 0.0
        %358 = vmatprep.subr.mxu0 0.0
        %359 = vmatpush1.msra.mxu0 0.0
        %360 = vmatprep.subr.mxu0 0.0
        %361 = vmatpush1.msra.mxu0 0.0
        %362 = vmatprep.subr.mxu0 0.0
        %363 = vmatpush1.msra.mxu0 0.0
        %364 = vmatprep.subr.mxu0 0.0
        %365 = vmatpush1.msra.mxu0 0.0
        %366 = vmatprep.subr.mxu0 0.0
        %367 = vmatpush1.msra.mxu0 0.0
        %368 = vmatprep.subr.mxu0 0.0
        %369 = vmatpush1.msra.mxu0 0.0
        %370 = vmatprep.subr.mxu0 0.0
        %371 = vmatpush1.msra.mxu0 0.0
        %372 = vmatprep.subr.mxu0 0.0
        %373 = vmatpush1.msra.mxu0 0.0
        %374 = vmatprep.subr.mxu0 0.0
        %375 = vmatpush1.msra.mxu0 0.0
        %376 = vmatprep.subr.mxu0 0.0
        %377 = vmatpush1.msra.mxu0 0.0
        %378 = vmatprep.subr.mxu0 0.0
        %379 = vmatpush1.msra.mxu0 0.0
        %380 = vmatprep.mubr.f32.mxu0 0.0
        %v381 = vand.u32 %v152, 4294901760
        %v382 = vsub.f32 %v152, %v381
        %383 = vmatmul.mubr.f32.gmra.mrb[0].mxu0 %v382
        %v384 = vpop.f32.mrb[0].mxu0
        %v385 = vadd.f32 %v309, %v384
        %v386 = vpop.f32.mrb[0].mxu0
        %387 = vdwg.mxu0
        %388 = vmatprep.subr.mxu0 0.0
        %v389 = vand.u32 %v148, 4294901760
        %390 = vmatpush1.msra.mxu0 %v389
        %391 = vmatprep.subr.mxu0 0.0
        %v392 = vand.u32 %v149, 4294901760
        %393 = vmatpush1.msra.mxu0 %v392
        %394 = vmatprep.subr.mxu0 0.0
        %395 = vmatpush1.msra.mxu0 0.0
        %396 = vmatprep.subr.mxu0 0.0
        %397 = vmatpush1.msra.mxu0 0.0
        %398 = vmatprep.subr.mxu0 0.0
        %399 = vmatpush1.msra.mxu0 0.0
        %400 = vmatprep.subr.mxu0 0.0
        %401 = vmatpush1.msra.mxu0 0.0
        %402 = vmatprep.subr.mxu0 0.0
        %403 = vmatpush1.msra.mxu0 0.0
        %404 = vmatprep.subr.mxu0 0.0
        %405 = vmatpush1.msra.mxu0 0.0
        %406 = vmatprep.subr.mxu0 0.0
        %407 = vmatpush1.msra.mxu0 0.0
        %408 = vmatprep.subr.mxu0 0.0
        %409 = vmatpush1.msra.mxu0 0.0
        %410 = vmatprep.subr.mxu0 0.0
        %411 = vmatpush1.msra.mxu0 0.0
        %412 = vmatprep.subr.mxu0 0.0
        %413 = vmatpush1.msra.mxu0 0.0
        %414 = vmatprep.subr.mxu0 0.0
        %415 = vmatpush1.msra.mxu0 0.0
        %416 = vmatprep.subr.mxu0 0.0
        %417 = vmatpush1.msra.mxu0 0.0
        %418 = vmatprep.subr.mxu0 0.0
        %419 = vmatpush1.msra.mxu0 0.0
        %420 = vmatprep.subr.mxu0 0.0
        %421 = vmatpush1.msra.mxu0 0.0
        %422 = vmatprep.subr.mxu0 0.0
        %423 = vmatpush1.msra.mxu0 0.0
        %424 = vmatprep.subr.mxu0 0.0
        %425 = vmatpush1.msra.mxu0 0.0
        %426 = vmatprep.subr.mxu0 0.0
        %427 = vmatpush1.msra.mxu0 0.0
        %428 = vmatprep.subr.mxu0 0.0
        %429 = vmatpush1.msra.mxu0 0.0
        %430 = vmatprep.subr.mxu0 0.0
        %431 = vmatpush1.msra.mxu0 0.0
        %432 = vmatprep.subr.mxu0 0.0
        %433 = vmatpush1.msra.mxu0 0.0
        %434 = vmatprep.subr.mxu0 0.0
        %435 = vmatpush1.msra.mxu0 0.0
        %436 = vmatprep.subr.mxu0 0.0
        %437 = vmatpush1.msra.mxu0 0.0
        %438 = vmatprep.subr.mxu0 0.0
        %439 = vmatpush1.msra.mxu0 0.0
        %440 = vmatprep.subr.mxu0 0.0
        %441 = vmatpush1.msra.mxu0 0.0
        %442 = vmatprep.subr.mxu0 0.0
        %443 = vmatpush1.msra.mxu0 0.0
        %444 = vmatprep.subr.mxu0 0.0
        %445 = vmatpush1.msra.mxu0 0.0
        %446 = vmatprep.subr.mxu0 0.0
        %447 = vmatpush1.msra.mxu0 0.0
        %448 = vmatprep.subr.mxu0 0.0
        %449 = vmatpush1.msra.mxu0 0.0
        %450 = vmatprep.subr.mxu0 0.0
        %451 = vmatpush1.msra.mxu0 0.0
        %452 = vmatprep.subr.mxu0 0.0
        %453 = vmatpush1.msra.mxu0 0.0
        %454 = vmatprep.mubr.f32.mxu0 0.0
        %v455 = vand.u32 %v152, 4294901760
        %v456 = vsub.f32 %v152, %v455
        %v457 = vand.u32 %v456, 4294901760
        %458 = vmatmul.mubr.f32.gmra.mrb[0].mxu0 %v457
        %v459 = vpop.f32.mrb[0].mxu0
        %v460 = vadd.f32 %v385, %v459
        %v461 = vpop.f32.mrb[0].mxu0
        %462 = vdwg.mxu0
        %463 = vmatprep.subr.mxu0 0.0
        %v464 = vand.u32 %v148, 4294901760
        %v465 = vsub.f32 %v148, %v464
        %v466 = vand.u32 %v465, 4294901760
        %467 = vmatpush1.msra.mxu0 %v466
        %468 = vmatprep.subr.mxu0 0.0
        %v469 = vand.u32 %v149, 4294901760
        %v470 = vsub.f32 %v149, %v469
        %v471 = vand.u32 %v470, 4294901760
        %472 = vmatpush1.msra.mxu0 %v471
        %473 = vmatprep.subr.mxu0 0.0
        %474 = vmatpush1.msra.mxu0 0.0
        %475 = vmatprep.subr.mxu0 0.0
        %476 = vmatpush1.msra.mxu0 0.0
        %477 = vmatprep.subr.mxu0 0.0
        %478 = vmatpush1.msra.mxu0 0.0
        %479 = vmatprep.subr.mxu0 0.0
        %480 = vmatpush1.msra.mxu0 0.0
        %481 = vmatprep.subr.mxu0 0.0
        %482 = vmatpush1.msra.mxu0 0.0
        %483 = vmatprep.subr.mxu0 0.0
        %484 = vmatpush1.msra.mxu0 0.0
        %485 = vmatprep.subr.mxu0 0.0
        %486 = vmatpush1.msra.mxu0 0.0
        %487 = vmatprep.subr.mxu0 0.0
        %488 = vmatpush1.msra.mxu0 0.0
        %489 = vmatprep.subr.mxu0 0.0
        %490 = vmatpush1.msra.mxu0 0.0
        %491 = vmatprep.subr.mxu0 0.0
        %492 = vmatpush1.msra.mxu0 0.0
        %493 = vmatprep.subr.mxu0 0.0
        %494 = vmatpush1.msra.mxu0 0.0
        %495 = vmatprep.subr.mxu0 0.0
        %496 = vmatpush1.msra.mxu0 0.0
        %497 = vmatprep.subr.mxu0 0.0
        %498 = vmatpush1.msra.mxu0 0.0
        %499 = vmatprep.subr.mxu0 0.0
        %500 = vmatpush1.msra.mxu0 0.0
        %501 = vmatprep.subr.mxu0 0.0
        %502 = vmatpush1.msra.mxu0 0.0
        %503 = vmatprep.subr.mxu0 0.0
        %504 = vmatpush1.msra.mxu0 0.0
        %505 = vmatprep.subr.mxu0 0.0
        %506 = vmatpush1.msra.mxu0 0.0
        %507 = vmatprep.subr.mxu0 0.0
        %508 = vmatpush1.msra.mxu0 0.0
        %509 = vmatprep.subr.mxu0 0.0
        %510 = vmatpush1.msra.mxu0 0.0
        %511 = vmatprep.subr.mxu0 0.0
        %512 = vmatpush1.msra.mxu0 0.0
        %513 = vmatprep.subr.mxu0 0.0
        %514 = vmatpush1.msra.mxu0 0.0
        %515 = vmatprep.subr.mxu0 0.0
        %516 = vmatpush1.msra.mxu0 0.0
        %517 = vmatprep.subr.mxu0 0.0
        %518 = vmatpush1.msra.mxu0 0.0
        %519 = vmatprep.subr.mxu0 0.0
        %520 = vmatpush1.msra.mxu0 0.0
        %521 = vmatprep.subr.mxu0 0.0
        %522 = vmatpush1.msra.mxu0 0.0
        %523 = vmatprep.subr.mxu0 0.0
        %524 = vmatpush1.msra.mxu0 0.0
        %525 = vmatprep.subr.mxu0 0.0
        %526 = vmatpush1.msra.mxu0 0.0
        %527 = vmatprep.subr.mxu0 0.0
        %528 = vmatpush1.msra.mxu0 0.0
        %529 = vmatprep.subr.mxu0 0.0
        %530 = vmatpush1.msra.mxu0 0.0
        %531 = vmatprep.subr.mxu0 0.0
        %532 = vmatpush1.msra.mxu0 0.0
        %533 = vmatprep.mubr.f32.mxu0 0.0
        %v534 = vand.u32 %v152, 4294901760
        %535 = vmatmul.mubr.f32.gmra.mrb[0].mxu0 %v534
        %v536 = vpop.f32.mrb[0].mxu0
        %v537 = vadd.f32 %v460, %v536
        %v538 = vpop.f32.mrb[0].mxu0
        %539 = vdwg.mxu0
        %540 = vmatprep.subr.mxu0 0.0
        %v541 = vand.u32 %v148, 4294901760
        %542 = vmatpush1.msra.mxu0 %v541
        %543 = vmatprep.subr.mxu0 0.0
        %v544 = vand.u32 %v149, 4294901760
        %545 = vmatpush1.msra.mxu0 %v544
        %546 = vmatprep.subr.mxu0 0.0
        %547 = vmatpush1.msra.mxu0 0.0
        %548 = vmatprep.subr.mxu0 0.0
        %549 = vmatpush1.msra.mxu0 0.0
        %550 = vmatprep.subr.mxu0 0.0
        %551 = vmatpush1.msra.mxu0 0.0
        %552 = vmatprep.subr.mxu0 0.0
        %553 = vmatpush1.msra.mxu0 0.0
        %554 = vmatprep.subr.mxu0 0.0
        %555 = vmatpush1.msra.mxu0 0.0
        %556 = vmatprep.subr.mxu0 0.0
        %557 = vmatpush1.msra.mxu0 0.0
        %558 = vmatprep.subr.mxu0 0.0
        %559 = vmatpush1.msra.mxu0 0.0
        %560 = vmatprep.subr.mxu0 0.0
        %561 = vmatpush1.msra.mxu0 0.0
        %562 = vmatprep.subr.mxu0 0.0
        %563 = vmatpush1.msra.mxu0 0.0
        %564 = vmatprep.subr.mxu0 0.0
        %565 = vmatpush1.msra.mxu0 0.0
        %566 = vmatprep.subr.mxu0 0.0
        %567 = vmatpush1.msra.mxu0 0.0
        %568 = vmatprep.subr.mxu0 0.0
        %569 = vmatpush1.msra.mxu0 0.0
        %570 = vmatprep.subr.mxu0 0.0
        %571 = vmatpush1.msra.mxu0 0.0
        %572 = vmatprep.subr.mxu0 0.0
        %573 = vmatpush1.msra.mxu0 0.0
        %574 = vmatprep.subr.mxu0 0.0
        %575 = vmatpush1.msra.mxu0 0.0
        %576 = vmatprep.subr.mxu0 0.0
        %577 = vmatpush1.msra.mxu0 0.0
        %578 = vmatprep.subr.mxu0 0.0
        %579 = vmatpush1.msra.mxu0 0.0
        %580 = vmatprep.subr.mxu0 0.0
        %581 = vmatpush1.msra.mxu0 0.0
        %582 = vmatprep.subr.mxu0 0.0
        %583 = vmatpush1.msra.mxu0 0.0
        %584 = vmatprep.subr.mxu0 0.0
        %585 = vmatpush1.msra.mxu0 0.0
        %586 = vmatprep.subr.mxu0 0.0
        %587 = vmatpush1.msra.mxu0 0.0
        %588 = vmatprep.subr.mxu0 0.0
        %589 = vmatpush1.msra.mxu0 0.0
        %590 = vmatprep.subr.mxu0 0.0
        %591 = vmatpush1.msra.mxu0 0.0
        %592 = vmatprep.subr.mxu0 0.0
        %593 = vmatpush1.msra.mxu0 0.0
        %594 = vmatprep.subr.mxu0 0.0
        %595 = vmatpush1.msra.mxu0 0.0
        %596 = vmatprep.subr.mxu0 0.0
        %597 = vmatpush1.msra.mxu0 0.0
        %598 = vmatprep.subr.mxu0 0.0
        %599 = vmatpush1.msra.mxu0 0.0
        %600 = vmatprep.subr.mxu0 0.0
        %601 = vmatpush1.msra.mxu0 0.0
        %602 = vmatprep.subr.mxu0 0.0
        %603 = vmatpush1.msra.mxu0 0.0
        %604 = vmatprep.subr.mxu0 0.0
        %605 = vmatpush1.msra.mxu0 0.0
        %606 = vmatprep.mubr.f32.mxu0 0.0
        %v607 = vand.u32 %v152, 4294901760
        %608 = vmatmul.mubr.f32.gmra.mrb[0].mxu0 %v607
        %v609 = vpop.f32.mrb[0].mxu0
        %v610 = vadd.f32 %v537, %v609
        %v611 = vpop.f32.mrb[0].mxu0
        %612 = vdwg.mxu0
        %613 = vst [vmem:[%s134] sm:$0xff] %v610
        %s614 = sand.u32 %s71, 1
        %s615 = scalar_lea.sflag [#allocation3], %s614
        %s616 = sand.u32 %s71, 1
        %s617 = smul.addr %s616, 8
        %s618 = scalar_lea.vmem [#allocation2], %s617
        // Predicated region
        $region29: #{tpu_custom_call.1} parent=27 // pred_check
          %p619 = pneg %p81
        $region30: #{tpu_custom_call.1} parent=27 // pred_check_branch
          %621 = sbr.rel (%p619) target = $region32
        $region31: #{tpu_custom_call.1} parent=27 // pred_region
          %s623 = ssub.s32 128, 128
          %624 = vsyncadd %s615, %s623
          %s625 = smul.addr %s16, 128
          %s626 = scalar_lea.hbm %s2, %s625
          %s628 = sshll.u32 %s618, 4
          %s629 = int_to_ptr.vmem [resolvable:$true] %s628
          %631 = dma.vmem_to_hbm [thread:$0]  %s629, 128, %s626, %s615
        $region32: #{tpu_custom_call.1} parent=27 // pred_fallthru
          _
      $region28: #{tpu_custom_call.1} parent=5 // pred_fallthru
        _
      %p632 = scmp.le.s32.totalorder 2, %s11
      // Predicated region
      $region33: #{tpu_custom_call.1} parent=5 // pred_check
        %p633 = pneg %p632
      $region34: #{tpu_custom_call.1} parent=5 // pred_check_branch
        %635 = sbr.rel (%p633) target = $region36
      $region35: #{tpu_custom_call.1} parent=5 // pred_region
        %s636 = ssub.s32 %s11, 2
        // Predicated region
        $region37: #{tpu_custom_call.1} parent=35 // pred_check
          %p637 = pneg %p87
        $region38: #{tpu_custom_call.1} parent=35 // pred_check_branch
          %639 = sbr.rel (%p637) target = $region40
        $region39: #{tpu_custom_call.1} parent=35 // pred_region
          %s640 = sand.u32 %s72, 1
          %s641 = scalar_lea.sflag [#allocation3], %s640
          %s642 = sand.u32 %s72, 1
          %s643 = smul.addr %s642, 8
          %s644 = scalar_lea.vmem [#allocation2], %s643
          %645 = dma.done %s641, 128
        $region40: #{tpu_custom_call.1} parent=35 // pred_fallthru
          _
      $region36: #{tpu_custom_call.1} parent=5 // pred_fallthru
        _
    $region6: #{tpu_custom_call.1} parent=1 // loop_footer
      %s15 = sadd.s32 1, %s11
    $region7: #{tpu_custom_call.1} parent=1 // loop_footer_branch
      %10 = sbr.rel target = $region3
    $region8: #{tpu_custom_call.1} parent=1 // loop_exit
      _
    %646 = vsyncpa [#allocation3], 1
    %s647 = scalar_lea.sflag [#allocation3], 1
    %648 = vsyncpa %s647, 1

</llo_original>
